<compile_context>
chip_gen: v7x
topology: tpu7x:2x2x1
jax: 0.10.0
libtpu: 0.0.40
codegen_flags: <defaults>
</compile_context>

<pallas_src>
import jax
import jax.numpy as jnp
from jax.experimental import pallas as pl
from jax.experimental.pallas import tpu as pltpu

BN_EPS = 1e-5
_VMEM_LIMIT = 32 * 1024 * 1024


# --------------------------------------------------------------------------- #
# Kernels
# --------------------------------------------------------------------------- #
def _stats1_kernel(x_ref, m_ref, w1_ref, xb_ref, s1_ref, q1_ref, cnt_ref):
    """Pass 1: fused f32->bf16 cast of x + masked Σh1, Σh1², Σmask.
    Accumulators are per-batch partials, resident across the point-tile axis."""
    @pl.when(pl.program_id(1) == 0)
    def _():
        s1_ref[...] = jnp.zeros_like(s1_ref)
        q1_ref[...] = jnp.zeros_like(q1_ref)
        cnt_ref[...] = jnp.zeros_like(cnt_ref)

    xb = x_ref[...].astype(jnp.bfloat16)                      # [Cin, tn]
    xb_ref[...] = xb                                          # bf16 copy for passes 2-3
    m = m_ref[...].astype(jnp.float32)                        # [1, tn]

    h1 = jnp.dot(w1_ref[...], xb,
                 preferred_element_type=jnp.float32)          # [d1, tn] f32
    hm = h1 * m
    s1_ref[...] += jnp.sum(hm, axis=1, keepdims=True)
    q1_ref[...] += jnp.sum(hm * h1, axis=1, keepdims=True)
    cnt_ref[...] += jnp.sum(m, axis=1, keepdims=True)


def _stats2_kernel(xb_ref, m_ref, w1s_ref, sh1_ref, w2_ref, s2_ref, q2_ref):
    """Pass 2: recompute conv1 (BN1 scale folded into W1), +shift, ReLU, then
    masked Σh2, Σh2² of the raw conv2 output.  Per-batch partial accumulators."""
    @pl.when(pl.program_id(1) == 0)
    def _():
        s2_ref[...] = jnp.zeros_like(s2_ref)
        q2_ref[...] = jnp.zeros_like(q2_ref)

    m = m_ref[...].astype(jnp.float32)
    h1 = jnp.dot(w1s_ref[...], xb_ref[...],
                 preferred_element_type=jnp.float32)
    a1 = jnp.maximum(h1 + sh1_ref[...], 0.0)                  # folded BN1 + ReLU
    # TODO(synk): dropout1 is treated as identity (inference mode, no PRNG dropout)
    h2 = jnp.dot(w2_ref[...], a1.astype(jnp.bfloat16),
                 preferred_element_type=jnp.float32)          # [d2, tn]
    hm = h2 * m
    s2_ref[...] += jnp.sum(hm, axis=1, keepdims=True)
    q2_ref[...] += jnp.sum(hm * h2, axis=1, keepdims=True)


def _apply_kernel(xb_ref, w1s_ref, sh1_ref, w2s_ref, sh2_ref, w3_ref, b3_ref,
                  out_ref):
    """Pass 3: full forward with BN scales folded into W1/W2; lane-dense store."""
    h1 = jnp.maximum(
        jnp.dot(w1s_ref[...], xb_ref[...],
                preferred_element_type=jnp.float32) + sh1_ref[...], 0.0)
    h2 = jnp.maximum(
        jnp.dot(w2s_ref[...], h1.astype(jnp.bfloat16),
                preferred_element_type=jnp.float32) + sh2_ref[...], 0.0)
    out = jnp.dot(w3_ref[...], h2.astype(jnp.bfloat16),
                  preferred_element_type=jnp.float32) + b3_ref[...]
    out_ref[...] = out.astype(out_ref.dtype)                  # [num_cls, tn]


# --------------------------------------------------------------------------- #
# Wrapper
# --------------------------------------------------------------------------- #
def seg_head_forward(x, point_mask, params, *, tile_n=8192, out_dtype=jnp.float32):
    """x: [B, Cin, N] (PyTorch NCL, f32). point_mask: [B, N] bool (or None).
    Returns segmentation logits [B, num_seg_classes, N] (out_dtype)."""
    w1, g1, b1, w2, g2, b2, w3, b3 = params
    B, Cin, N = x.shape
    d1 = w1.shape[0]
    d2 = w2.shape[0]
    ncls = w3.shape[0]

    if point_mask is None:
        point_mask = jnp.ones((B, N), dtype=bool)
    # bf16 mask is exact for {0,1}; halves the in-kernel mask reads vs f32.
    mask = point_mask[:, None, :].astype(jnp.bfloat16)        # [B, 1, N]

    # Pad the point axis only if the tile does not divide it (mask pad = 0
    # keeps the stats exact); the common divisible case pays no extra copy.
    if N <= tile_n:
        tn, Np = N, N
    else:
        tn = tile_n
        Np = pl.cdiv(N, tn) * tn
        if Np != N:
            x = jnp.pad(x, ((0, 0), (0, 0), (0, Np - N)))
            mask = jnp.pad(mask, ((0, 0), (0, 0), (0, Np - N)))
    grid = (B, Np // tn)

    w1b = w1.astype(jnp.bfloat16)
    w2b = w2.astype(jnp.bfloat16)
    w3b = w3.astype(jnp.bfloat16)
    b3r = b3.reshape(ncls, 1).astype(jnp.float32)

    x_spec = pl.BlockSpec((None, Cin, tn), lambda b, j: (b, 0, j))
    xb_spec = pl.BlockSpec((None, Cin, tn), lambda b, j: (b, 0, j))
    m_spec = pl.BlockSpec((None, 1, tn), lambda b, j: (b, 0, j))

    def rep(arr):  # small replicated parameter block (whole array, resident)
        nd = arr.ndim
        return pl.BlockSpec(arr.shape, lambda b, j, nd=nd: (0,) * nd)

    def part(d):   # per-batch partial accumulator, resident across the j axis
        return pl.BlockSpec((None, d, 1), lambda b, j: (b, 0, 0))

    stats_params = pltpu.CompilerParams(
        dimension_semantics=("parallel", "arbitrary"),  # batch axis megacore-shards
        vmem_limit_bytes=_VMEM_LIMIT)
    par_params = pltpu.CompilerParams(
        dimension_semantics=("parallel", "parallel"),
        vmem_limit_bytes=_VMEM_LIMIT)

    M = B * Np
    out_isize = jnp.dtype(out_dtype).itemsize

    # ---- pass 1: masked Σh1, Σh1², Σmask + bf16(x) ---------------------------
    xb, s1, q1, cnt = pl.pallas_call(
        _stats1_kernel,
        grid=grid,
        in_specs=[x_spec, m_spec, rep(w1b)],
        out_specs=(xb_spec, part(d1), part(d1), part(1)),
        out_shape=(jax.ShapeDtypeStruct((B, Cin, Np), jnp.bfloat16),
                   jax.ShapeDtypeStruct((B, d1, 1), jnp.float32),
                   jax.ShapeDtypeStruct((B, d1, 1), jnp.float32),
                   jax.ShapeDtypeStruct((B, 1, 1), jnp.float32)),
        compiler_params=stats_params,
        cost_estimate=pl.CostEstimate(
            flops=2 * M * Cin * d1, transcendentals=0,
            bytes_accessed=M * Cin * 4 + M * 2 + M * Cin * 2),
    )(x, mask, w1b)

    # Tiny jnp epilogue: reduce the B partials and fold BN1 into (W1, shift1).
    cnt_total = jnp.maximum(jnp.sum(cnt), 1.0)                # guard empty mask
    mean1 = jnp.sum(s1, axis=0) / cnt_total                   # [d1, 1]
    var1 = jnp.maximum(jnp.sum(q1, axis=0) / cnt_total - mean1 * mean1, 0.0)
    scale1 = g1.reshape(d1, 1) * jax.lax.rsqrt(var1 + BN_EPS)
    shift1 = (b1.reshape(d1, 1) - mean1 * scale1).astype(jnp.float32)
    w1s = (scale1 * w1).astype(jnp.bfloat16)                  # BN1 scale folded

    # ---- pass 2: masked Σh2, Σh2² --------------------------------------------
    s2, q2 = pl.pallas_call(
        _stats2_kernel,
        grid=grid,
        in_specs=[xb_spec, m_spec, rep(w1s), rep(shift1), rep(w2b)],
        out_specs=(part(d2), part(d2)),
        out_shape=(jax.ShapeDtypeStruct((B, d2, 1), jnp.float32),
                   jax.ShapeDtypeStruct((B, d2, 1), jnp.float32)),
        compiler_params=stats_params,
        cost_estimate=pl.CostEstimate(
            flops=2 * M * (Cin * d1 + d1 * d2), transcendentals=0,
            bytes_accessed=M * Cin * 2 + M * 2),
    )(xb, mask, w1s, shift1, w2b)

    mean2 = jnp.sum(s2, axis=0) / cnt_total                   # [d2, 1]
    var2 = jnp.maximum(jnp.sum(q2, axis=0) / cnt_total - mean2 * mean2, 0.0)
    scale2 = g2.reshape(d2, 1) * jax.lax.rsqrt(var2 + BN_EPS)
    shift2 = (b2.reshape(d2, 1) - mean2 * scale2).astype(jnp.float32)
    w2s = (scale2 * w2).astype(jnp.bfloat16)                  # BN2 scale folded

    # ---- pass 3: apply (fully parallel over tiles, lane-dense output) --------
    out_spec = pl.BlockSpec((None, ncls, tn), lambda b, j: (b, 0, j))
    logits = pl.pallas_call(
        _apply_kernel,
        grid=grid,
        in_specs=[xb_spec, rep(w1s), rep(shift1), rep(w2s), rep(shift2),
                  rep(w3b), rep(b3r)],
        out_specs=out_spec,
        out_shape=jax.ShapeDtypeStruct((B, ncls, Np), out_dtype),
        compiler_params=par_params,
        cost_estimate=pl.CostEstimate(
            flops=2 * M * (Cin * d1 + d1 * d2 + d2 * ncls), transcendentals=0,
            bytes_accessed=M * Cin * 2 + M * ncls * out_isize),
    )(xb, w1s, shift1, w2s, shift2, w3b, b3r)

    return logits[:, :, :N] if Np != N else logits


# --------------------------------------------------------------------------- #
# Pure-JAX reference (f32) and params
# --------------------------------------------------------------------------- #
def seg_head_reference(x, point_mask, params):
    w1, g1, b1, w2, g2, b2, w3, b3 = params
    mask = point_mask[:, None, :].astype(jnp.float32)
    cnt = jnp.maximum(jnp.sum(mask), 1.0)

    def conv(h, w):
        return jnp.einsum('oc,bcn->bon', w, h)

    def masked_bn(h, gamma, beta):
        mean = jnp.sum(h * mask, axis=(0, 2), keepdims=True) / cnt
        var = jnp.sum(((h - mean) ** 2) * mask, axis=(0, 2), keepdims=True) / cnt
        hn = (h - mean) * jax.lax.rsqrt(var + BN_EPS)
        return hn * gamma[None, :, None] + beta[None, :, None]

    h = jnp.maximum(masked_bn(conv(x, w1), g1, b1), 0.0)
    h = jnp.maximum(masked_bn(conv(h, w2), g2, b2), 0.0)
    return conv(h, w3) + b3[None, :, None]


def init_params(key, in_channels, seg_head_dim, num_seg_classes):
    ks = jax.random.split(key, 8)
    d1, d2 = seg_head_dim, seg_head_dim // 2
    # conv weights stored in PyTorch orientation [Cout, Cin] so kernels do W @ X
    w1 = jax.random.normal(ks[0], (d1, in_channels), jnp.float32) * 0.05
    g1 = 1.0 + 0.1 * jax.random.normal(ks[1], (d1,), jnp.float32)
    b1 = 0.1 * jax.random.normal(ks[2], (d1,), jnp.float32)
    w2 = jax.random.normal(ks[3], (d2, d1), jnp.float32) * 0.05
    g2 = 1.0 + 0.1 * jax.random.normal(ks[4], (d2,), jnp.float32)
    b2 = 0.1 * jax.random.normal(ks[5], (d2,), jnp.float32)
    w3 = jax.random.normal(ks[6], (num_seg_classes, d2), jnp.float32) * 0.05
    b3 = jax.random.normal(ks[7], (num_seg_classes,), jnp.float32) * 0.05
    return (w1, g1, b1, w2, g2, b2, w3, b3)


if __name__ == "__main__":
    # SegmentationHead(encoder_dim=8, label_embedding_dim=4, upsampling_dim=4,
    #                  seg_head_dim=32, seg_head_dropout=0.5, num_seg_classes=5)
    encoder_dim = 8
    label_embedding_dim = 4
    upsampling_dim = 4
    seg_head_dim = 32
    num_seg_classes = 5
    in_channels = 2 * encoder_dim + label_embedding_dim + upsampling_dim  # 24

    B, N = 2, 16

    key = jax.random.PRNGKey(0)
    kx, kp = jax.random.split(key)
    params = init_params(kp, in_channels, seg_head_dim, num_seg_classes)

    x = jax.random.normal(kx, (B, in_channels, N), jnp.float32)   # [B, C, N]
    # deterministic ragged mask: batch 0 has 16 valid points, batch 1 has 10
    lengths = jnp.array([16, 10], dtype=jnp.int32)
    point_mask = jnp.arange(N)[None, :] < lengths[:, None]        # [B, N] bool

    logits = seg_head_forward(x, point_mask, params)
    jax.block_until_ready(logits)
    assert logits.shape == (B, num_seg_classes, N)

    ref = seg_head_reference(x, point_mask, params)
    err = float(jnp.max(jnp.abs(logits - ref)))
    assert err < 0.1, f"max abs err vs f32 reference: {err}"
    print("KERNEL_OK")
</pallas_src>

<mosaic_0001>
module attributes {stable_mosaic.version = 11 : i64} {
  func.func @_stats1_kernel(%arg0: i32, %arg1: i32, %arg2: memref<1x24x16xf32, #tpu.memory_space<vmem>>, %arg3: memref<1x1x16xbf16, #tpu.memory_space<vmem>>, %arg4: memref<32x24xbf16, #tpu.memory_space<vmem>>, %arg5: memref<1x24x16xbf16, #tpu.memory_space<vmem>>, %arg6: memref<1x32x1xf32, #tpu.memory_space<vmem>>, %arg7: memref<1x32x1xf32, #tpu.memory_space<vmem>>, %arg8: memref<1x1x1xf32, #tpu.memory_space<vmem>>) attributes {dimension_semantics = [#tpu.dimension_semantics<parallel>, #tpu.dimension_semantics<arbitrary>], iteration_bounds = array<i64: 2, 1>, scalar_prefetch = 0 : i64, scratch_operands = 0 : i64, tpu.core_type = #tpu.core_type<tc>, window_params = [{transform_indices = @transform_0, window_bounds = array<i64: 1, 24, 16>}, {transform_indices = @transform_1, window_bounds = array<i64: 1, 1, 16>}, {pipeline_mode = #tpu.pipeline_mode<synchronous>, transform_indices = @transform_2, window_bounds = array<i64: 32, 24>}, {transform_indices = @transform_3, window_bounds = array<i64: 1, 24, 16>}, {transform_indices = @transform_4, window_bounds = array<i64: 1, 32, 1>}, {transform_indices = @transform_5, window_bounds = array<i64: 1, 32, 1>}, {transform_indices = @transform_6, window_bounds = array<i64: 1, 1, 1>}]} {
    %c0_i32 = arith.constant 0 : i32
    %0 = arith.cmpi eq, %arg1, %c0_i32 : i32
    %1 = arith.extui %0 : i1 to i32
    %c0_i32_0 = arith.constant 0 : i32
    %2 = arith.cmpi ne, %1, %c0_i32_0 : i32
    scf.if %2 {
      %cst_32 = arith.constant 0.000000e+00 : f32
      %41 = vector.broadcast %cst_32 : f32 to vector<32x1xf32>
      %c0_33 = arith.constant 0 : index
      %c0_34 = arith.constant 0 : index
      %c0_35 = arith.constant 0 : index
      %42 = vector.load %arg6[%c0_33, %c0_34, %c0_35] : memref<1x32x1xf32, #tpu.memory_space<vmem>>, vector<1x32x1xf32>
      %43 = vector.shape_cast %42 : vector<1x32x1xf32> to vector<32x1xf32>
      %44 = vector.shape_cast %41 : vector<32x1xf32> to vector<1x32x1xf32>
      tpu.vector_store %arg6[%c0_33, %c0_34, %c0_35], %44 {strides = array<i32>} : memref<1x32x1xf32, #tpu.memory_space<vmem>>, vector<1x32x1xf32>,
      %cst_36 = arith.constant 0.000000e+00 : f32
      %45 = vector.broadcast %cst_36 : f32 to vector<32x1xf32>
      %c0_37 = arith.constant 0 : index
      %c0_38 = arith.constant 0 : index
      %c0_39 = arith.constant 0 : index
      %46 = vector.load %arg7[%c0_37, %c0_38, %c0_39] : memref<1x32x1xf32, #tpu.memory_space<vmem>>, vector<1x32x1xf32>
      %47 = vector.shape_cast %46 : vector<1x32x1xf32> to vector<32x1xf32>
      %48 = vector.shape_cast %45 : vector<32x1xf32> to vector<1x32x1xf32>
      tpu.vector_store %arg7[%c0_37, %c0_38, %c0_39], %48 {strides = array<i32>} : memref<1x32x1xf32, #tpu.memory_space<vmem>>, vector<1x32x1xf32>,
      %cst_40 = arith.constant 0.000000e+00 : f32
      %49 = vector.broadcast %cst_40 : f32 to vector<1x1xf32>
      %c0_41 = arith.constant 0 : index
      %c0_42 = arith.constant 0 : index
      %c0_43 = arith.constant 0 : index
      %50 = vector.load %arg8[%c0_41, %c0_42, %c0_43] : memref<1x1x1xf32, #tpu.memory_space<vmem>>, vector<1x1x1xf32>
      %51 = vector.shape_cast %50 : vector<1x1x1xf32> to vector<1x1xf32>
      %52 = vector.shape_cast %49 : vector<1x1xf32> to vector<1x1x1xf32>
      tpu.vector_store %arg8[%c0_41, %c0_42, %c0_43], %52 {strides = array<i32>} : memref<1x1x1xf32, #tpu.memory_space<vmem>>, vector<1x1x1xf32>,
    } else {
    }
    %c0 = arith.constant 0 : index
    %c0_1 = arith.constant 0 : index
    %c0_2 = arith.constant 0 : index
    %3 = vector.load %arg2[%c0, %c0_1, %c0_2] : memref<1x24x16xf32, #tpu.memory_space<vmem>>, vector<1x24x16xf32>
    %4 = vector.shape_cast %3 : vector<1x24x16xf32> to vector<24x16xf32>
    %5 = arith.truncf %4 : vector<24x16xf32> to vector<24x16xbf16>
    %c0_3 = arith.constant 0 : index
    %c0_4 = arith.constant 0 : index
    %c0_5 = arith.constant 0 : index
    %6 = vector.load %arg5[%c0_3, %c0_4, %c0_5] : memref<1x24x16xbf16, #tpu.memory_space<vmem>>, vector<1x24x16xbf16>
    %7 = vector.shape_cast %6 : vector<1x24x16xbf16> to vector<24x16xbf16>
    %8 = vector.shape_cast %5 : vector<24x16xbf16> to vector<1x24x16xbf16>
    tpu.vector_store %arg5[%c0_3, %c0_4, %c0_5], %8 {strides = array<i32>} : memref<1x24x16xbf16, #tpu.memory_space<vmem>>, vector<1x24x16xbf16>,
    %c0_6 = arith.constant 0 : index
    %c0_7 = arith.constant 0 : index
    %c0_8 = arith.constant 0 : index
    %9 = vector.load %arg3[%c0_6, %c0_7, %c0_8] : memref<1x1x16xbf16, #tpu.memory_space<vmem>>, vector<1x1x16xbf16>
    %10 = vector.shape_cast %9 : vector<1x1x16xbf16> to vector<1x16xbf16>
    %11 = arith.extf %10 : vector<1x16xbf16> to vector<1x16xf32>
    %c0_9 = arith.constant 0 : index
    %c0_10 = arith.constant 0 : index
    %12 = vector.load %arg4[%c0_9, %c0_10] : memref<32x24xbf16, #tpu.memory_space<vmem>>, vector<32x24xbf16>
    %cst = arith.constant dense<0.000000e+00> : vector<32x16xf32>
    %13 = tpu.matmul %12, %5, %cst {dimension_numbers = #tpu.dot_dimension_numbers<[1], [0], [0], [1], [0, 0, 1, 1], [], []>} : vector<32x24xbf16>, vector<24x16xbf16>, vector<32x16xf32> -> vector<32x16xf32>
    %14 = vector.broadcast %11 : vector<1x16xf32> to vector<32x16xf32>
    %15 = arith.mulf %13, %14 : vector<32x16xf32>
    %c0_11 = arith.constant 0 : index
    %c0_12 = arith.constant 0 : index
    %c0_13 = arith.constant 0 : index
    %16 = vector.load %arg6[%c0_11, %c0_12, %c0_13] : memref<1x32x1xf32, #tpu.memory_space<vmem>>, vector<1x32x1xf32>
    %17 = vector.shape_cast %16 : vector<1x32x1xf32> to vector<32x1xf32>
    %cst_14 = arith.constant dense<0.000000e+00> : vector<32xf32>
    %18 = vector.multi_reduction <add>, %15, %cst_14 [1] : vector<32x16xf32> to vector<32xf32>
    %19 = vector.shape_cast %18 : vector<32xf32> to vector<32x1xf32>
    %20 = arith.addf %17, %19 : vector<32x1xf32>
    %c0_15 = arith.constant 0 : index
    %c0_16 = arith.constant 0 : index
    %c0_17 = arith.constant 0 : index
    %21 = vector.load %arg6[%c0_15, %c0_16, %c0_17] : memref<1x32x1xf32, #tpu.memory_space<vmem>>, vector<1x32x1xf32>
    %22 = vector.shape_cast %21 : vector<1x32x1xf32> to vector<32x1xf32>
    %23 = vector.shape_cast %20 : vector<32x1xf32> to vector<1x32x1xf32>
    tpu.vector_store %arg6[%c0_15, %c0_16, %c0_17], %23 {strides = array<i32>} : memref<1x32x1xf32, #tpu.memory_space<vmem>>, vector<1x32x1xf32>,
    %c0_18 = arith.constant 0 : index
    %c0_19 = arith.constant 0 : index
    %c0_20 = arith.constant 0 : index
    %24 = vector.load %arg7[%c0_18, %c0_19, %c0_20] : memref<1x32x1xf32, #tpu.memory_space<vmem>>, vector<1x32x1xf32>
    %25 = vector.shape_cast %24 : vector<1x32x1xf32> to vector<32x1xf32>
    %26 = arith.mulf %15, %13 : vector<32x16xf32>
    %cst_21 = arith.constant dense<0.000000e+00> : vector<32xf32>
    %27 = vector.multi_reduction <add>, %26, %cst_21 [1] : vector<32x16xf32> to vector<32xf32>
    %28 = vector.shape_cast %27 : vector<32xf32> to vector<32x1xf32>
    %29 = arith.addf %25, %28 : vector<32x1xf32>
    %c0_22 = arith.constant 0 : index
    %c0_23 = arith.constant 0 : index
    %c0_24 = arith.constant 0 : index
    %30 = vector.load %arg7[%c0_22, %c0_23, %c0_24] : memref<1x32x1xf32, #tpu.memory_space<vmem>>, vector<1x32x1xf32>
    %31 = vector.shape_cast %30 : vector<1x32x1xf32> to vector<32x1xf32>
    %32 = vector.shape_cast %29 : vector<32x1xf32> to vector<1x32x1xf32>
    tpu.vector_store %arg7[%c0_22, %c0_23, %c0_24], %32 {strides = array<i32>} : memref<1x32x1xf32, #tpu.memory_space<vmem>>, vector<1x32x1xf32>,
    %c0_25 = arith.constant 0 : index
    %c0_26 = arith.constant 0 : index
    %c0_27 = arith.constant 0 : index
    %33 = vector.load %arg8[%c0_25, %c0_26, %c0_27] : memref<1x1x1xf32, #tpu.memory_space<vmem>>, vector<1x1x1xf32>
    %34 = vector.shape_cast %33 : vector<1x1x1xf32> to vector<1x1xf32>
    %cst_28 = arith.constant dense<0.000000e+00> : vector<1xf32>
    %35 = vector.multi_reduction <add>, %11, %cst_28 [1] : vector<1x16xf32> to vector<1xf32>
    %36 = vector.shape_cast %35 : vector<1xf32> to vector<1x1xf32>
    %37 = arith.addf %34, %36 : vector<1x1xf32>
    %c0_29 = arith.constant 0 : index
    %c0_30 = arith.constant 0 : index
    %c0_31 = arith.constant 0 : index
    %38 = vector.load %arg8[%c0_29, %c0_30, %c0_31] : memref<1x1x1xf32, #tpu.memory_space<vmem>>, vector<1x1x1xf32>
    %39 = vector.shape_cast %38 : vector<1x1x1xf32> to vector<1x1xf32>
    %40 = vector.shape_cast %37 : vector<1x1xf32> to vector<1x1x1xf32>
    tpu.vector_store %arg8[%c0_29, %c0_30, %c0_31], %40 {strides = array<i32>} : memref<1x1x1xf32, #tpu.memory_space<vmem>>, vector<1x1x1xf32>,
    return
  }
  func.func @transform_0(%arg0: i32, %arg1: i32) -> (i32, i32, i32) {
    %c0_i32 = arith.constant 0 : i32
    %c0_i32_0 = arith.constant 0 : i32
    return %arg0, %c0_i32, %arg1 : i32, i32, i32
  }
  func.func @transform_1(%arg0: i32, %arg1: i32) -> (i32, i32, i32) {
    %c0_i32 = arith.constant 0 : i32
    %c0_i32_0 = arith.constant 0 : i32
    return %arg0, %c0_i32, %arg1 : i32, i32, i32
  }
  func.func @transform_2(%arg0: i32, %arg1: i32) -> (i32, i32) {
    %c0_i32 = arith.constant 0 : i32
    %c0_i32_0 = arith.constant 0 : i32
    %c0_i32_1 = arith.constant 0 : i32
    return %c0_i32, %c0_i32_0 : i32, i32
  }
  func.func @transform_3(%arg0: i32, %arg1: i32) -> (i32, i32, i32) {
    %c0_i32 = arith.constant 0 : i32
    %c0_i32_0 = arith.constant 0 : i32
    return %arg0, %c0_i32, %arg1 : i32, i32, i32
  }
  func.func @transform_4(%arg0: i32, %arg1: i32) -> (i32, i32, i32) {
    %c0_i32 = arith.constant 0 : i32
    %c0_i32_0 = arith.constant 0 : i32
    %c0_i32_1 = arith.constant 0 : i32
    return %arg0, %c0_i32, %c0_i32_0 : i32, i32, i32
  }
  func.func @transform_5(%arg0: i32, %arg1: i32) -> (i32, i32, i32) {
    %c0_i32 = arith.constant 0 : i32
    %c0_i32_0 = arith.constant 0 : i32
    %c0_i32_1 = arith.constant 0 : i32
    return %arg0, %c0_i32, %c0_i32_0 : i32, i32, i32
  }
  func.func @transform_6(%arg0: i32, %arg1: i32) -> (i32, i32, i32) {
    %c0_i32 = arith.constant 0 : i32
    %c0_i32_0 = arith.constant 0 : i32
    %c0_i32_1 = arith.constant 0 : i32
    return %arg0, %c0_i32, %c0_i32_0 : i32, i32, i32
  }
}

</mosaic_0001>

<llo_original>
// kernel: tpu_custom_call.1
$region0: #{tpu_custom_call.1}
  #allocation0 [shape = 'u32[]', space=smem, size = 0x4, offset = 0x4, fixed_abs, tag = 'smem constant byte address 0x4 - core index']
  #allocation1 [shape = 'u32[144,128]{1,0:T(1,128)}', space=vmem, size = 0x12000, scoped, tag = 'internal scratch']
  %s0 = inlined_call_operand.vmem [shape: f32[2,24,16], index: 0, kind: input, shape index: {}]
  %s1 = inlined_call_operand.vmem [shape: bf16[2,1,16], index: 1, kind: input, shape index: {}]
  %s2 = inlined_call_operand.vmem [shape: bf16[32,24], index: 2, kind: input, shape index: {}]
  %s3 = inlined_call_operand.vmem [shape: bf16[2,24,16], index: 3, kind: output, shape index: {0}]
  %s4 = inlined_call_operand.vmem [shape: f32[2,32,1], index: 4, kind: output, shape index: {1}]
  %s5 = inlined_call_operand.vmem [shape: f32[2,32,1], index: 5, kind: output, shape index: {2}]
  %s6 = inlined_call_operand.vmem [shape: f32[2,1,1], index: 6, kind: output, shape index: {3}]
  %7 = xla_tuple %s3, %s4, %s5, %s6
  %s8 = sld [smem:[#allocation0]]
  $region73: #{tpu_custom_call.1} parent=0
    _
  %s10 = ssub.s32 1, %s8
  %s11 = scalar_select 0, %s10, %s8
  loop: start=0, step=1, limit=4
  $region2: #{tpu_custom_call.1} parent=0 // loop_pre_header
    _
  $region3: #{tpu_custom_call.1} parent=0 // loop_header
    %s13 = sphi 0, %s17
    %p14 = scmp.ge.s32.totalorder %s13, 4
    %s20 = sphi 0, %s32
    %s21 = sphi 0, %s28
    %s22 = sphi 0, %s20
    %s23 = sphi 0, %s21
    %s24 = sphi 0, %s22
    %s25 = sphi 0, %s23
    %s37 = sphi 0, %s39
    %s40 = sphi 0, %s37
    %s41 = sphi 0, %s40
    %s57 = sphi 0, %s41
    %s65 = sphi 0, %s67
    %s68 = sphi 0, %s65
    %s69 = sphi 0, %s68
    %s85 = sphi 0, %s69
    %s89 = sphi 0, %s89
    %s91 = sphi 0, %s89
    %s92 = sphi 0, %s91
    %s106 = sphi 0, %s92
    %s114 = sphi 0, %s116
    %s117 = sphi 0, %s114
    %s118 = sphi 0, %s117
    %s134 = sphi 0, %s118
    %s140 = sphi 0, %s142
    %s143 = sphi 0, %s140
    %s144 = sphi 0, %s143
    %s160 = sphi 0, %s144
    %s166 = sphi 0, %s168
    %s169 = sphi 0, %s166
    %s170 = sphi 0, %s169
    %s186 = sphi 0, %s170
    %s192 = sphi 0, %s194
    %s195 = sphi 0, %s192
    %s196 = sphi 0, %s195
    %s212 = sphi 0, %s196
  $region4: #{tpu_custom_call.1} parent=0 // loop_header_branch
    %16 = sbr.rel (%p14) target = $region8
  $region5: #{tpu_custom_call.1} parent=0 // loop_body
    %s18 = ssub.s32 %s13, 1
    %s19 = ssub.s32 %s13, 2
    %s26 = sadd.s32 1, %s21
    %p27 = scmp.ge.s32.totalorder %s26, 1
    %s28 = scalar_select %p27, 0, %s26
    %s29 = sadd.s32 1, %s20
    %s30 = scalar_select %p27, %s29, %s20
    %p31 = scmp.ge.s32.totalorder %s30, 2
    %s32 = scalar_select %p31, 0, %s30
    %s33 = ssub.s32 %s20, %s32
    %s34 = ssub.s32 %s21, %s28
    %s35 = sor.u32 %s33, %s34
    %p36 = scmp.eq.s32.totalorder %s35, 0
    %s38 = sadd.s32 %s37, 1
    %s39 = scalar_select %p36, %s37, %s38
    %p42 = pneg %p36
    %p43 = scmp.eq.s32.totalorder %s13, 1
    %p44 = por %p42, %p43
    %p45 = scmp.ne.s32.totalorder %s37, %s40
    %p46 = scmp.eq.s32.totalorder %s13, 0
    %p47 = por %p45, %p46
    %p48 = scmp.ne.s32.totalorder %s37, %s40
    %p49 = scmp.eq.s32.totalorder %s18, 1
    %p50 = por %p48, %p49
    %p51 = scmp.ne.s32.totalorder %s40, %s41
    %p52 = scmp.eq.s32.totalorder %s18, 0
    %p53 = por %p51, %p52
    %p54 = scmp.ne.s32.totalorder %s40, %s41
    %p55 = scmp.eq.s32.totalorder %s19, 1
    %p56 = por %p54, %p55
    %p58 = scmp.ne.s32.totalorder %s41, %s57
    %p59 = scmp.eq.s32.totalorder %s19, 0
    %p60 = por %p58, %p59
    %s61 = ssub.s32 %s20, %s32
    %s62 = ssub.s32 %s21, %s28
    %s63 = sor.u32 %s61, %s62
    %p64 = scmp.eq.s32.totalorder %s63, 0
    %s66 = sadd.s32 %s65, 1
    %s67 = scalar_select %p64, %s65, %s66
    %p70 = pneg %p64
    %p71 = scmp.eq.s32.totalorder %s13, 1
    %p72 = por %p70, %p71
    %p73 = scmp.ne.s32.totalorder %s65, %s68
    %p74 = scmp.eq.s32.totalorder %s13, 0
    %p75 = por %p73, %p74
    %p76 = scmp.ne.s32.totalorder %s65, %s68
    %p77 = scmp.eq.s32.totalorder %s18, 1
    %p78 = por %p76, %p77
    %p79 = scmp.ne.s32.totalorder %s68, %s69
    %p80 = scmp.eq.s32.totalorder %s18, 0
    %p81 = por %p79, %p80
    %p82 = scmp.ne.s32.totalorder %s68, %s69
    %p83 = scmp.eq.s32.totalorder %s19, 1
    %p84 = por %p82, %p83
    %p86 = scmp.ne.s32.totalorder %s69, %s85
    %p87 = scmp.eq.s32.totalorder %s19, 0
    %p88 = por %p86, %p87
    %s90 = sadd.s32 %s89, 1
    %p93 = scmp.eq.s32.totalorder %s13, 1
    %p94 = scmp.ne.s32.totalorder %s89, %s91
    %p95 = scmp.eq.s32.totalorder %s13, 0
    %p96 = por %p94, %p95
    %p97 = scmp.ne.s32.totalorder %s89, %s91
    %p98 = scmp.eq.s32.totalorder %s18, 1
    %p99 = por %p97, %p98
    %p100 = scmp.ne.s32.totalorder %s91, %s92
    %p101 = scmp.eq.s32.totalorder %s18, 0
    %p102 = por %p100, %p101
    %p103 = scmp.ne.s32.totalorder %s91, %s92
    %p104 = scmp.eq.s32.totalorder %s19, 1
    %p105 = por %p103, %p104
    %p107 = scmp.ne.s32.totalorder %s92, %s106
    %p108 = scmp.eq.s32.totalorder %s19, 0
    %p109 = por %p107, %p108
    %s110 = ssub.s32 %s20, %s32
    %s111 = ssub.s32 %s21, %s28
    %s112 = sor.u32 %s110, %s111
    %p113 = scmp.eq.s32.totalorder %s112, 0
    %s115 = sadd.s32 %s114, 1
    %s116 = scalar_select %p113, %s114, %s115
    %p119 = pneg %p113
    %p120 = scmp.eq.s32.totalorder %s13, 1
    %p121 = por %p119, %p120
    %p122 = scmp.ne.s32.totalorder %s114, %s117
    %p123 = scmp.eq.s32.totalorder %s13, 0
    %p124 = por %p122, %p123
    %p125 = scmp.ne.s32.totalorder %s114, %s117
    %p126 = scmp.eq.s32.totalorder %s18, 1
    %p127 = por %p125, %p126
    %p128 = scmp.ne.s32.totalorder %s117, %s118
    %p129 = scmp.eq.s32.totalorder %s18, 0
    %p130 = por %p128, %p129
    %p131 = scmp.ne.s32.totalorder %s117, %s118
    %p132 = scmp.eq.s32.totalorder %s19, 1
    %p133 = por %p131, %p132
    %p135 = scmp.ne.s32.totalorder %s118, %s134
    %p136 = scmp.eq.s32.totalorder %s19, 0
    %p137 = por %p135, %p136
    %s138 = ssub.s32 %s20, %s32
    %p139 = scmp.eq.s32.totalorder %s138, 0
    %s141 = sadd.s32 %s140, 1
    %s142 = scalar_select %p139, %s140, %s141
    %p145 = pneg %p139
    %p146 = scmp.eq.s32.totalorder %s13, 1
    %p147 = por %p145, %p146
    %p148 = scmp.ne.s32.totalorder %s140, %s143
    %p149 = scmp.eq.s32.totalorder %s13, 0
    %p150 = por %p148, %p149
    %p151 = scmp.ne.s32.totalorder %s140, %s143
    %p152 = scmp.eq.s32.totalorder %s18, 1
    %p153 = por %p151, %p152
    %p154 = scmp.ne.s32.totalorder %s143, %s144
    %p155 = scmp.eq.s32.totalorder %s18, 0
    %p156 = por %p154, %p155
    %p157 = scmp.ne.s32.totalorder %s143, %s144
    %p158 = scmp.eq.s32.totalorder %s19, 1
    %p159 = por %p157, %p158
    %p161 = scmp.ne.s32.totalorder %s144, %s160
    %p162 = scmp.eq.s32.totalorder %s19, 0
    %p163 = por %p161, %p162
    %s164 = ssub.s32 %s20, %s32
    %p165 = scmp.eq.s32.totalorder %s164, 0
    %s167 = sadd.s32 %s166, 1
    %s168 = scalar_select %p165, %s166, %s167
    %p171 = pneg %p165
    %p172 = scmp.eq.s32.totalorder %s13, 1
    %p173 = por %p171, %p172
    %p174 = scmp.ne.s32.totalorder %s166, %s169
    %p175 = scmp.eq.s32.totalorder %s13, 0
    %p176 = por %p174, %p175
    %p177 = scmp.ne.s32.totalorder %s166, %s169
    %p178 = scmp.eq.s32.totalorder %s18, 1
    %p179 = por %p177, %p178
    %p180 = scmp.ne.s32.totalorder %s169, %s170
    %p181 = scmp.eq.s32.totalorder %s18, 0
    %p182 = por %p180, %p181
    %p183 = scmp.ne.s32.totalorder %s169, %s170
    %p184 = scmp.eq.s32.totalorder %s19, 1
    %p185 = por %p183, %p184
    %p187 = scmp.ne.s32.totalorder %s170, %s186
    %p188 = scmp.eq.s32.totalorder %s19, 0
    %p189 = por %p187, %p188
    %s190 = ssub.s32 %s20, %s32
    %p191 = scmp.eq.s32.totalorder %s190, 0
    %s193 = sadd.s32 %s192, 1
    %s194 = scalar_select %p191, %s192, %s193
    %p197 = pneg %p191
    %p198 = scmp.eq.s32.totalorder %s13, 1
    %p199 = por %p197, %p198
    %p200 = scmp.ne.s32.totalorder %s192, %s195
    %p201 = scmp.eq.s32.totalorder %s13, 0
    %p202 = por %p200, %p201
    %p203 = scmp.ne.s32.totalorder %s192, %s195
    %p204 = scmp.eq.s32.totalorder %s18, 1
    %p205 = por %p203, %p204
    %p206 = scmp.ne.s32.totalorder %s195, %s196
    %p207 = scmp.eq.s32.totalorder %s18, 0
    %p208 = por %p206, %p207
    %p209 = scmp.ne.s32.totalorder %s195, %s196
    %p210 = scmp.eq.s32.totalorder %s19, 1
    %p211 = por %p209, %p210
    %p213 = scmp.ne.s32.totalorder %s196, %s212
    %p214 = scmp.eq.s32.totalorder %s19, 0
    %p215 = por %p213, %p214
    %p216 = scmp.le.s32.totalorder 1, %s13
    %p217 = scmp.lt.s32.totalorder %s13, 3
    %p218 = pnand %p216, %p217
    %p219 = pneg %p218
    // Predicated region
    $region9: #{tpu_custom_call.1} parent=5 // pred_check
      _
    $region10: #{tpu_custom_call.1} parent=5 // pred_check_branch
      %221 = sbr.rel (%p218) target = $region12
    $region11: #{tpu_custom_call.1} parent=5 // pred_region
      %s222 = ssub.s32 %s13, 1
      // Predicated region
      $region13: #{tpu_custom_call.1} parent=11 // pred_check
        %p223 = pneg %p102
      $region14: #{tpu_custom_call.1} parent=11 // pred_check_branch
        %225 = sbr.rel (%p223) target = $region16
      $region15: #{tpu_custom_call.1} parent=11 // pred_region
        _
      $region16: #{tpu_custom_call.1} parent=11 // pred_fallthru
        _
    $region12: #{tpu_custom_call.1} parent=5 // pred_fallthru
      _
    %p226 = scmp.lt.s32.totalorder %s13, 2
    // Predicated region
    $region17: #{tpu_custom_call.1} parent=5 // pred_check
      %p227 = pneg %p226
    $region18: #{tpu_custom_call.1} parent=5 // pred_check_branch
      %229 = sbr.rel (%p227) target = $region20
    $region19: #{tpu_custom_call.1} parent=5 // pred_region
      // Predicated region
      $region21: #{tpu_custom_call.1} parent=19 // pred_check
        %p230 = pneg %p47
      $region22: #{tpu_custom_call.1} parent=19 // pred_check_branch
        %232 = sbr.rel (%p230) target = $region24
      $region23: #{tpu_custom_call.1} parent=19 // pred_region
        %p233 = scmp.lt.s32.totalorder %s20, 1
        %s234 = scalar_select %p233, %s20, 1
        %p235 = scmp.lt.s32.totalorder %s21, 0
        %s236 = scalar_select %p235, %s21, 0
        %s237 = smul.addr %s234, 3
        %s238 = sadd.s32 %s236, %s237
        %s239 = smul.addr %s238, 8
        %s240 = scalar_lea.vmem %s0, %s239
      $region24: #{tpu_custom_call.1} parent=19 // pred_fallthru
        _
      // Predicated region
      $region25: #{tpu_custom_call.1} parent=19 // pred_check
        %p241 = pneg %p75
      $region26: #{tpu_custom_call.1} parent=19 // pred_check_branch
        %243 = sbr.rel (%p241) target = $region28
      $region27: #{tpu_custom_call.1} parent=19 // pred_region
        %p244 = scmp.lt.s32.totalorder %s20, 1
        %s245 = scalar_select %p244, %s20, 1
        %p246 = scmp.lt.s32.totalorder %s21, 0
        %s247 = scalar_select %p246, %s21, 0
        %s248 = sadd.s32 %s247, %s245
        %s249 = scalar_lea.vmem %s1, %s248
      $region28: #{tpu_custom_call.1} parent=19 // pred_fallthru
        _
    $region20: #{tpu_custom_call.1} parent=5 // pred_fallthru
      _
    %p250 = scmp.le.s32.totalorder 1, %s13
    %p251 = scmp.lt.s32.totalorder %s13, 3
    %p252 = pnand %p250, %p251
    %p253 = pneg %p252
    // Predicated region
    $region29: #{tpu_custom_call.1} parent=5 // pred_check
      _
    $region30: #{tpu_custom_call.1} parent=5 // pred_check_branch
      %255 = sbr.rel (%p252) target = $region32
    $region31: #{tpu_custom_call.1} parent=5 // pred_region
      %s256 = ssub.s32 %s13, 1
      %p257 = scmp.lt.s32.totalorder %s22, 1
      %s258 = scalar_select %p257, %s22, 1
      %p259 = scmp.lt.s32.totalorder %s23, 0
      %s260 = scalar_select %p259, %s23, 0
      %s261 = smul.addr %s258, 3
      %s262 = sadd.s32 %s260, %s261
      %s263 = smul.addr %s262, 8
      %s264 = scalar_lea.vmem %s0, %s263
      %p265 = pneg %p53
      %p266 = pneg %p50
      %p267 = scmp.lt.s32.totalorder %s22, 1
      %s268 = scalar_select %p267, %s22, 1
      %p269 = scmp.lt.s32.totalorder %s23, 0
      %s270 = scalar_select %p269, %s23, 0
      %s271 = sadd.s32 %s270, %s268
      %s272 = scalar_lea.vmem %s1, %s271
      %p273 = pneg %p81
      %p274 = pneg %p78
      %p275 = pneg %p102
      %p276 = pneg %p99
      %p277 = pneg %p130
      %p278 = pneg %p127
      %p279 = scmp.lt.s32.totalorder %s22, 1
      %s280 = scalar_select %p279, %s22, 1
      %p281 = scmp.lt.s32.totalorder %s23, 0
      %s282 = scalar_select %p281, %s23, 0
      %s283 = smul.addr %s280, 3
      %s284 = sadd.s32 %s282, %s283
      %s285 = smul.addr %s284, 4
      %s286 = scalar_lea.vmem %s3, %s285
      %p287 = pneg %p156
      %p288 = pneg %p153
      %p289 = scmp.lt.s32.totalorder %s22, 1
      %s290 = scalar_select %p289, %s22, 1
      %s291 = smul.addr %s290, 4
      %s292 = smul.addr %s291, 8
      %s293 = scalar_lea.vmem %s4, %s292
      %p294 = pneg %p182
      %p295 = pneg %p179
      %p296 = scmp.lt.s32.totalorder %s22, 1
      %s297 = scalar_select %p296, %s22, 1
      %s298 = smul.addr %s297, 4
      %s299 = smul.addr %s298, 8
      %s300 = scalar_lea.vmem %s5, %s299
      %p301 = pneg %p208
      %p302 = pneg %p205
      %p303 = scmp.lt.s32.totalorder %s22, 1
      %s304 = scalar_select %p303, %s22, 1
      %s305 = scalar_lea.vmem %s6, %s304
      %p306 = scmp.lt.s32.totalorder %s22, 1
      %s307 = scalar_select %p306, %s22, 1
      %p308 = scmp.lt.s32.totalorder %s23, 0
      %s309 = scalar_select %p308, %s23, 0
      %s310 = smul.addr %s307, 3
      %s311 = sadd.s32 %s309, %s310
      %s312 = smul.addr %s311, 8
      %s313 = scalar_lea.vmem %s0, %s312
      %p314 = scmp.lt.s32.totalorder %s22, 1
      %s315 = scalar_select %p314, %s22, 1
      %p316 = scmp.lt.s32.totalorder %s23, 0
      %s317 = scalar_select %p316, %s23, 0
      %s318 = sadd.s32 %s317, %s315
      %s319 = scalar_lea.vmem %s1, %s318
      %p320 = scmp.lt.s32.totalorder %s22, 1
      %s321 = scalar_select %p320, %s22, 1
      %p322 = scmp.lt.s32.totalorder %s23, 0
      %s323 = scalar_select %p322, %s23, 0
      %s324 = smul.addr %s321, 3
      %s325 = sadd.s32 %s323, %s324
      %s326 = smul.addr %s325, 4
      %s327 = scalar_lea.vmem %s3, %s326
      %p328 = scmp.lt.s32.totalorder %s22, 1
      %s329 = scalar_select %p328, %s22, 1
      %s330 = smul.addr %s329, 4
      %s331 = smul.addr %s330, 8
      %s332 = scalar_lea.vmem %s4, %s331
      %p333 = scmp.lt.s32.totalorder %s22, 1
      %s334 = scalar_select %p333, %s22, 1
      %s335 = smul.addr %s334, 4
      %s336 = smul.addr %s335, 8
      %s337 = scalar_lea.vmem %s5, %s336
      %p338 = scmp.lt.s32.totalorder %s22, 1
      %s339 = scalar_select %p338, %s22, 1
      %s340 = scalar_lea.vmem %s6, %s339
      %p342 = scmp.eq.s32.totalorder %s23, 0
      // Predicated region
      $region33: #{tpu_custom_call.1} parent=31 // pred_check
        %p343 = pneg %p342
      $region34: #{tpu_custom_call.1} parent=31 // pred_check_branch
        %345 = sbr.rel (%p343) target = $region36
      $region35: #{tpu_custom_call.1} parent=31 // pred_region
        %vm346 = vcmask 7168
        %347 = vst.msk [vmem:[%s332] sm:$0xff] %vm346, 0.0
        %348 = vst.msk [vmem:[%s332 + $0x8] sm:$0xff] %vm346, 0.0
        %349 = vst.msk [vmem:[%s332 + $0x10] sm:$0xff] %vm346, 0.0
        %350 = vst.msk [vmem:[%s332 + $0x18] sm:$0xff] %vm346, 0.0
        %351 = vst.msk [vmem:[%s337] sm:$0xff] %vm346, 0.0
        %352 = vst.msk [vmem:[%s337 + $0x8] sm:$0xff] %vm346, 0.0
        %353 = vst.msk [vmem:[%s337 + $0x10] sm:$0xff] %vm346, 0.0
        %354 = vst.msk [vmem:[%s337 + $0x18] sm:$0xff] %vm346, 0.0
        %vm355 = vcmask 0
        %356 = vst.msk [vmem:[%s340] sm:$0x1] %vm355, 0.0
      $region36: #{tpu_custom_call.1} parent=31 // pred_fallthru
        _
      %v357 = vld [vmem:[%s313] sm:$0xff]
      %v358 = vld [vmem:[%s313 + $0x8] sm:$0xff]
      %v359 = vld [vmem:[%s313 + $0x10] sm:$0xff]
      %v360 = vpack.c.bf16 %v358, %v357
      %v361 = vpack.c.bf16 %v359, %v359
      %v364 = vunpack.c.l.b16 %v360
      %v365 = vunpack.c.h.b16 %v360
      %v366 = vunpack.c.l.b16 %v361
      %v367 = vpack.c.b16 %v364, %v364
      %v368 = vpack.c.b16 %v365, %v365
      %v369 = vpack.c.b16 %v366, %v366
      %vm373 = vcmask 125952
      %374 = vst.msk [vmem:[%s327] sm:$0xf] %vm373, %v367
      %375 = vst.msk [vmem:[%s327 + $0x4] sm:$0xf] %vm373, %v368
      %376 = vst.msk [vmem:[%s327 + $0x8] sm:$0xf] %vm373, %v369
      %v377 = vld [vmem:[%s319] sm:$0x1]
      %v378 = vunpack.c.l.bf16 %v377
      %v379 = vld [vmem:[%s2] sm:$0xf]
      %v380 = vld [vmem:[%s2 + $0x4] sm:$0xf]
      %v381 = vld [vmem:[%s2 + $0x8] sm:$0xf]
      %v382 = vld [vmem:[%s2 + $0xc] sm:$0xf]
      %v387 = vunpack.c.l.b16 %v379
      %v388 = vunpack.c.l.b16 %v380
      %v389 = vunpack.c.l.b16 %v381
      %v390 = vunpack.c.l.b16 %v382
      %v391 = vpack.c.b16 %v388, %v387
      %v392 = vpack.c.b16 %v390, %v389
      %vm393 = vcmask 195584
      %v395 = vsel %vm393, %v391, 0
      %v398 = vsel %vm393, %v392, 0
      %vm400 = vcmask 1043456
      %v402 = vsel %vm400, %v361, 0
      %404 = vmatprep.subr.bf16.mxu0 0
      %405 = vmatpush1.bf16.msra.mxu0 %v360
      %406 = vmatprep.subr.bf16.mxu0 0
      %407 = vmatpush1.bf16.msra.mxu0 %v402
      %408 = vmatprep.subr.bf16.mxu0 0
      %409 = vmatpush1.bf16.msra.mxu0 0
      %410 = vmatprep.subr.bf16.mxu0 0
      %411 = vmatpush1.bf16.msra.mxu0 0
      %412 = vmatprep.subr.bf16.mxu0 0
      %413 = vmatpush1.bf16.msra.mxu0 0
      %414 = vmatprep.subr.bf16.mxu0 0
      %415 = vmatpush1.bf16.msra.mxu0 0
      %416 = vmatprep.subr.bf16.mxu0 0
      %417 = vmatpush1.bf16.msra.mxu0 0
      %418 = vmatprep.subr.bf16.mxu0 0
      %419 = vmatpush1.bf16.msra.mxu0 0
      %420 = vmatprep.subr.bf16.mxu0 0
      %421 = vmatpush1.bf16.msra.mxu0 0
      %422 = vmatprep.subr.bf16.mxu0 0
      %423 = vmatpush1.bf16.msra.mxu0 0
      %424 = vmatprep.subr.bf16.mxu0 0
      %425 = vmatpush1.bf16.msra.mxu0 0
      %426 = vmatprep.subr.bf16.mxu0 0
      %427 = vmatpush1.bf16.msra.mxu0 0
      %428 = vmatprep.subr.bf16.mxu0 0
      %429 = vmatpush1.bf16.msra.mxu0 0
      %430 = vmatprep.subr.bf16.mxu0 0
      %431 = vmatpush1.bf16.msra.mxu0 0
      %432 = vmatprep.subr.bf16.mxu0 0
      %433 = vmatpush1.bf16.msra.mxu0 0
      %434 = vmatprep.subr.bf16.mxu0 0
      %435 = vmatpush1.bf16.msra.mxu0 0
      %436 = vmatprep.mubr.bf16.mxu0 0
      %437 = vmatmul.mubr.bf16.gmra.mrb[0].mxu0 %v395
      %v438 = vpop.f32.mrb[0].mxu0
      %v439 = vadd.f32 0.0, %v438
      %v440 = vpop.f32.mrb[0].mxu0
      %v441 = vpop.f32.mrb[0].mxu0
      %v442 = vadd.f32 0.0, %v441
      %v443 = vpop.f32.mrb[0].mxu0
      %444 = vmatprep.mubr.bf16.mxu0 0
      %445 = vmatmul.mubr.bf16.gmra.mrb[0].mxu0 %v398
      %v446 = vpop.f32.mrb[0].mxu0
      %v447 = vadd.f32 0.0, %v446
      %v448 = vpop.f32.mrb[0].mxu0
      %v449 = vpop.f32.mrb[0].mxu0
      %v450 = vadd.f32 0.0, %v449
      %v451 = vpop.f32.mrb[0].mxu0
      %452 = vdwg.mxu0
      %v453 = vlaneseq
      %v454 = vshrl.u32 %v453, 7
      %v455 = vsub.s32 0, %v454
      %v456 = vrot.slane %v378, %v455
      %v457 = vmul.f32 %v439, %v456
      %v458 = vmul.f32 %v442, %v456
      %v459 = vmul.f32 %v447, %v456
      %v460 = vmul.f32 %v450, %v456
      %v461 = vld [vmem:[%s332] sm:$0xff]
      %v462 = vld [vmem:[%s332 + $0x8] sm:$0xff]
      %v463 = vld [vmem:[%s332 + $0x10] sm:$0xff]
      %v464 = vld [vmem:[%s332 + $0x18] sm:$0xff]
      %vm465 = vcmask 130048
      %v466 = vsel %vm465, %v457, 0.0
      %467 = vadd.xlane.f32.xlu0 %v466
      %v468 = vpop.xlane.xlu0 %467
      %v469 = vsel %vm465, %v458, 0.0
      %470 = vadd.xlane.f32.xlu0 %v469
      %v471 = vpop.xlane.xlu0 %470
      %v472 = vsel %vm465, %v459, 0.0
      %473 = vadd.xlane.f32.xlu0 %v472
      %v474 = vpop.xlane.xlu0 %473
      %v475 = vsel %vm465, %v460, 0.0
      %476 = vadd.xlane.f32.xlu0 %v475
      %v477 = vpop.xlane.xlu0 %476
      %v478 = vadd.f32 %v461, %v468
      %v479 = vadd.f32 %v462, %v471
      %v480 = vadd.f32 %v463, %v474
      %v481 = vadd.f32 %v464, %v477
      %vm482 = vcmask 7168
      %483 = vst.msk [vmem:[%s332] sm:$0xff] %vm482, %v478
      %484 = vst.msk [vmem:[%s332 + $0x8] sm:$0xff] %vm482, %v479
      %485 = vst.msk [vmem:[%s332 + $0x10] sm:$0xff] %vm482, %v480
      %486 = vst.msk [vmem:[%s332 + $0x18] sm:$0xff] %vm482, %v481
      %v487 = vld [vmem:[%s337] sm:$0xff]
      %v488 = vld [vmem:[%s337 + $0x8] sm:$0xff]
      %v489 = vld [vmem:[%s337 + $0x10] sm:$0xff]
      %v490 = vld [vmem:[%s337 + $0x18] sm:$0xff]
      %v491 = vmul.f32 %v457, %v439
      %v492 = vmul.f32 %v458, %v442
      %v493 = vmul.f32 %v459, %v447
      %v494 = vmul.f32 %v460, %v450
      %v495 = vsel %vm465, %v491, 0.0
      %496 = vadd.xlane.f32.xlu0 %v495
      %v497 = vpop.xlane.xlu0 %496
      %v498 = vsel %vm465, %v492, 0.0
      %499 = vadd.xlane.f32.xlu0 %v498
      %v500 = vpop.xlane.xlu0 %499
      %v501 = vsel %vm465, %v493, 0.0
      %502 = vadd.xlane.f32.xlu0 %v501
      %v503 = vpop.xlane.xlu0 %502
      %v504 = vsel %vm465, %v494, 0.0
      %505 = vadd.xlane.f32.xlu0 %v504
      %v506 = vpop.xlane.xlu0 %505
      %v507 = vadd.f32 %v487, %v497
      %v508 = vadd.f32 %v488, %v500
      %v509 = vadd.f32 %v489, %v503
      %v510 = vadd.f32 %v490, %v506
      %511 = vst.msk [vmem:[%s337] sm:$0xff] %vm482, %v507
      %512 = vst.msk [vmem:[%s337 + $0x8] sm:$0xff] %vm482, %v508
      %513 = vst.msk [vmem:[%s337 + $0x10] sm:$0xff] %vm482, %v509
      %514 = vst.msk [vmem:[%s337 + $0x18] sm:$0xff] %vm482, %v510
      %v515 = vld [vmem:[%s340] sm:$0x1]
      %vm516 = vcmask 122880
      %v517 = vsel %vm516, %v378, 0.0
      %518 = vadd.xlane.f32.xlu0 %v517
      %v519 = vpop.xlane.xlu0 %518
      %v520 = vadd.f32 %v515, %v519
      %vm521 = vcmask 0
      %522 = vst.msk [vmem:[%s340] sm:$0x1] %vm521, %v520
      %p523 = scmp.lt.s32.totalorder %s22, 1
      %s524 = scalar_select %p523, %s22, 1
      %p525 = scmp.lt.s32.totalorder %s23, 0
      %s526 = scalar_select %p525, %s23, 0
      %s527 = smul.addr %s524, 3
      %s528 = sadd.s32 %s526, %s527
      %s529 = smul.addr %s528, 4
      %s530 = scalar_lea.vmem %s3, %s529
      %p531 = scmp.lt.s32.totalorder %s22, 1
      %s532 = scalar_select %p531, %s22, 1
      %s533 = smul.addr %s532, 4
      %s534 = smul.addr %s533, 8
      %s535 = scalar_lea.vmem %s4, %s534
      %p536 = scmp.lt.s32.totalorder %s22, 1
      %s537 = scalar_select %p536, %s22, 1
      %s538 = smul.addr %s537, 4
      %s539 = smul.addr %s538, 8
      %s540 = scalar_lea.vmem %s5, %s539
      %p541 = scmp.lt.s32.totalorder %s22, 1
      %s542 = scalar_select %p541, %s22, 1
      %s543 = scalar_lea.vmem %s6, %s542
      // Predicated region
      $region37: #{tpu_custom_call.1} parent=31 // pred_check
        %p544 = pneg %p127
      $region38: #{tpu_custom_call.1} parent=31 // pred_check_branch
        %546 = sbr.rel (%p544) target = $region40
      $region39: #{tpu_custom_call.1} parent=31 // pred_region
        _
      $region40: #{tpu_custom_call.1} parent=31 // pred_fallthru
        _
      // Predicated region
      $region41: #{tpu_custom_call.1} parent=31 // pred_check
        %p547 = pneg %p153
      $region42: #{tpu_custom_call.1} parent=31 // pred_check_branch
        %549 = sbr.rel (%p547) target = $region44
      $region43: #{tpu_custom_call.1} parent=31 // pred_region
        _
      $region44: #{tpu_custom_call.1} parent=31 // pred_fallthru
        _
      // Predicated region
      $region45: #{tpu_custom_call.1} parent=31 // pred_check
        %p550 = pneg %p179
      $region46: #{tpu_custom_call.1} parent=31 // pred_check_branch
        %552 = sbr.rel (%p550) target = $region48
      $region47: #{tpu_custom_call.1} parent=31 // pred_region
        _
      $region48: #{tpu_custom_call.1} parent=31 // pred_fallthru
        _
      // Predicated region
      $region49: #{tpu_custom_call.1} parent=31 // pred_check
        %p553 = pneg %p205
      $region50: #{tpu_custom_call.1} parent=31 // pred_check_branch
        %555 = sbr.rel (%p553) target = $region52
      $region51: #{tpu_custom_call.1} parent=31 // pred_region
        _
      $region52: #{tpu_custom_call.1} parent=31 // pred_fallthru
        _
    $region32: #{tpu_custom_call.1} parent=5 // pred_fallthru
      _
    %p556 = scmp.le.s32.totalorder 2, %s13
    // Predicated region
    $region53: #{tpu_custom_call.1} parent=5 // pred_check
      %p557 = pneg %p556
    $region54: #{tpu_custom_call.1} parent=5 // pred_check_branch
      %559 = sbr.rel (%p557) target = $region56
    $region55: #{tpu_custom_call.1} parent=5 // pred_region
      %s560 = ssub.s32 %s13, 2
      // Predicated region
      $region57: #{tpu_custom_call.1} parent=55 // pred_check
        %p561 = pneg %p133
      $region58: #{tpu_custom_call.1} parent=55 // pred_check_branch
        %563 = sbr.rel (%p561) target = $region60
      $region59: #{tpu_custom_call.1} parent=55 // pred_region
        %p564 = scmp.lt.s32.totalorder %s24, 1
        %s565 = scalar_select %p564, %s24, 1
        %p566 = scmp.lt.s32.totalorder %s25, 0
        %s567 = scalar_select %p566, %s25, 0
        %s568 = smul.addr %s565, 3
        %s569 = sadd.s32 %s567, %s568
        %s570 = smul.addr %s569, 4
        %s571 = scalar_lea.vmem %s3, %s570
      $region60: #{tpu_custom_call.1} parent=55 // pred_fallthru
        _
      // Predicated region
      $region61: #{tpu_custom_call.1} parent=55 // pred_check
        %p572 = pneg %p159
      $region62: #{tpu_custom_call.1} parent=55 // pred_check_branch
        %574 = sbr.rel (%p572) target = $region64
      $region63: #{tpu_custom_call.1} parent=55 // pred_region
        %p575 = scmp.lt.s32.totalorder %s24, 1
        %s576 = scalar_select %p575, %s24, 1
        %s577 = smul.addr %s576, 4
        %s578 = smul.addr %s577, 8
        %s579 = scalar_lea.vmem %s4, %s578
      $region64: #{tpu_custom_call.1} parent=55 // pred_fallthru
        _
      // Predicated region
      $region65: #{tpu_custom_call.1} parent=55 // pred_check
        %p580 = pneg %p185
      $region66: #{tpu_custom_call.1} parent=55 // pred_check_branch
        %582 = sbr.rel (%p580) target = $region68
      $region67: #{tpu_custom_call.1} parent=55 // pred_region
        %p583 = scmp.lt.s32.totalorder %s24, 1
        %s584 = scalar_select %p583, %s24, 1
        %s585 = smul.addr %s584, 4
        %s586 = smul.addr %s585, 8
        %s587 = scalar_lea.vmem %s5, %s586
      $region68: #{tpu_custom_call.1} parent=55 // pred_fallthru
        _
      // Predicated region
      $region69: #{tpu_custom_call.1} parent=55 // pred_check
        %p588 = pneg %p211
      $region70: #{tpu_custom_call.1} parent=55 // pred_check_branch
        %590 = sbr.rel (%p588) target = $region72
      $region71: #{tpu_custom_call.1} parent=55 // pred_region
        %p591 = scmp.lt.s32.totalorder %s24, 1
        %s592 = scalar_select %p591, %s24, 1
        %s593 = scalar_lea.vmem %s6, %s592
      $region72: #{tpu_custom_call.1} parent=55 // pred_fallthru
        _
    $region56: #{tpu_custom_call.1} parent=5 // pred_fallthru
      _
  $region6: #{tpu_custom_call.1} parent=0 // loop_footer
    %s17 = sadd.s32 1, %s13
  $region7: #{tpu_custom_call.1} parent=0 // loop_footer_branch
    %12 = sbr.rel target = $region3
  $region8: #{tpu_custom_call.1} parent=0 // loop_exit
    _

</llo_original>
